<compile_context>
chip_gen: v7x
topology: tpu7x:2x2x1
jax: 0.10.0
libtpu: 0.0.40
codegen_flags: <defaults>
</compile_context>

<pallas_src>
import functools

import jax
import jax.numpy as jnp
from jax import lax
from jax.experimental import pallas as pl
from jax.experimental.pallas import tpu as pltpu

GAMMA = 1.5
ALPHA = 0.25
LANES = 128          # vreg lane width
SUBLANES = 8         # (8, 128) vreg-shaped accumulator
CHUNK_ROWS = 128     # strip-mine chunk (rows) inside a tile
N_SPLIT = 2          # independent partial sums (v7x has 2 TensorCores)


def _qfocal_sum_kernel(pred_ref, true_ref, out_ref, *, gamma, alpha, valid_rows,
                       blocks_total, tm, n_tiles, chunk, ragged, dup):
    c = pl.program_id(0)
    j = pl.program_id(1)
    bid = c * n_tiles + j                     # logical (un-clamped) block id

    @pl.when(j == 0)
    def _init():
        out_ref[...] = jnp.zeros((1, SUBLANES, LANES), jnp.float32)

    n_chunks = tm // chunk

    def tile_sum(masked):
        block_row0 = bid * tm                 # only used by the boundary tile

        def body(i, acc):
            r0 = pl.multiple_of(i * chunk, chunk)
            x = pred_ref[pl.ds(r0, chunk), :].astype(jnp.float32)
            t = true_ref[pl.ds(r0, chunk), :].astype(jnp.float32)

            # Stable BCE-with-logits (== torch.nn.BCEWithLogitsLoss):
            #   max(x, 0) - x*t + log(1 + exp(-|x|))
            bce = jnp.maximum(x, 0.0) - x * t + jnp.log1p(jnp.exp(-jnp.abs(x)))

            # sigmoid via tanh: one EUP op, no divide / Newton-refinement chain
            # (EUP is the binding slot on v7x and for bf16 on v6e) and matches
            # XLA's own logistic expansion.
            p = 0.5 * jnp.tanh(0.5 * x) + 0.5

            alpha_factor = t * alpha + (1.0 - t) * (1.0 - alpha)
            m = jnp.abs(t - p)
            if gamma == 1.5:
                modulating = m * jnp.sqrt(m)   # cheaper than pow
            elif gamma == 2.0:
                modulating = m * m
            elif gamma == 1.0:
                modulating = m
            else:
                modulating = m ** gamma
            loss = bce * alpha_factor * modulating

            if masked:
                # Boundary tile only: row-index compare (int32-safe).  Must stay
                # a select, not a multiply: over-covered rows are garbage and may
                # contain NaN/Inf.
                row = lax.broadcasted_iota(jnp.int32, loss.shape, 0)
                loss = jnp.where(row + (block_row0 + r0) < valid_rows, loss, 0.0)

            # Pure-VALU fold onto the (8, 128) vreg-shaped partial sum.
            return acc + jnp.sum(
                loss.reshape(chunk // SUBLANES, SUBLANES, LANES), axis=0)

        return lax.fori_loop(0, n_chunks, body,
                             jnp.zeros((SUBLANES, LANES), jnp.float32))

    if ragged or dup:
        fast_limit = blocks_total - 1 if ragged else blocks_total

        @pl.when(bid < fast_limit)             # interior tiles: no mask work
        def _interior():
            out_ref[...] += tile_sum(False)[None]

        if ragged:
            @pl.when(bid == blocks_total - 1)  # single boundary tile: row mask
            def _boundary():
                out_ref[...] += tile_sum(True)[None]
        # bid >= blocks_total (clamped spare tile of an uneven split): skipped.
    else:
        out_ref[...] += tile_sum(False)[None]


def _round_down(x: int, m: int) -> int:
    return (x // m) * m


def qfocal_loss(pred, true, gamma=GAMMA, alpha=ALPHA, reduction="mean",
                tile_bytes=4 * 1024 * 1024):
    """QFocalLoss with 'mean' (default) or 'sum' reduction."""
    assert pred.shape == true.shape, (pred.shape, true.shape)
    total = int(pred.size)
    assert total > 0

    flat_p = pred.reshape(-1)
    flat_t = true.reshape(-1)

    # Lane-dense (rows, 128) view with rows % 8 == 0.  If total is already a
    # multiple of 8*128 this is a free reshape (no extra HBM pass).  Otherwise
    # pad only the <1024-element tail with zero-loss values so no column masking
    # is ever needed (mean denominator stays `total`).
    align = SUBLANES * LANES
    pad_n = (-total) % align
    if pad_n:
        flat_p = jnp.pad(flat_p, (0, pad_n))                         # pred = 0
        flat_t = jnp.pad(flat_t, (0, pad_n), constant_values=0.5)    # true = 0.5
    rows = (total + pad_n) // LANES
    p2d = flat_p.reshape(rows, LANES)
    t2d = flat_t.reshape(rows, LANES)

    # Row tile: ~tile_bytes of input per step (both operands, native dtype),
    # a multiple of the strip-mine chunk, never larger than the array.
    bytes_per_row = LANES * (p2d.dtype.itemsize + t2d.dtype.itemsize)
    tm = max(CHUNK_ROWS, _round_down(tile_bytes // bytes_per_row, CHUNK_ROWS))
    tm = min(tm, rows)
    if tm >= CHUNK_ROWS:
        tm = _round_down(tm, CHUNK_ROWS)
    chunk = min(CHUNK_ROWS, tm)

    blocks_total = pl.cdiv(rows, tm)
    n_split = min(N_SPLIT, blocks_total)
    n_tiles = pl.cdiv(blocks_total, n_split)
    ragged = (rows % tm) != 0                    # last real tile over-covers
    dup = n_split * n_tiles > blocks_total       # uneven split -> one spare tile

    kernel = functools.partial(
        _qfocal_sum_kernel,
        gamma=float(gamma), alpha=float(alpha), valid_rows=rows,
        blocks_total=blocks_total, tm=tm, n_tiles=n_tiles, chunk=chunk,
        ragged=ragged, dup=dup)

    nt, bt = n_tiles, blocks_total
    # Clamp the block index so the spare tile never DMAs out of bounds
    # (the kernel skips its accumulation).
    in_map = lambda c, j: (jnp.minimum(c * nt + j, bt - 1), 0)

    n_elems = rows * LANES
    cost = pl.CostEstimate(
        flops=25 * n_elems,
        transcendentals=4 * n_elems,
        bytes_accessed=n_elems * (p2d.dtype.itemsize + t2d.dtype.itemsize)
        + n_split * SUBLANES * LANES * 4)

    partials = pl.pallas_call(
        kernel,
        out_shape=jax.ShapeDtypeStruct((n_split, SUBLANES, LANES), jnp.float32),
        grid_spec=pltpu.PrefetchScalarGridSpec(
            num_scalar_prefetch=0,
            grid=(n_split, n_tiles),
            in_specs=[pl.BlockSpec((tm, LANES), in_map),
                      pl.BlockSpec((tm, LANES), in_map)],
            out_specs=pl.BlockSpec((1, SUBLANES, LANES), lambda c, j: (c, 0, 0)),
        ),
        compiler_params=pltpu.CompilerParams(
            # On v7x, switch the leading axis to pltpu.CORE_PARALLEL if the
            # xprof trace shows the 2-way split not landing on both TensorCores.
            dimension_semantics=("parallel", "arbitrary"),
            vmem_limit_bytes=32 * 1024 * 1024,
        ),
        cost_estimate=cost,
    )(p2d, t2d)

    loss_sum = jnp.sum(partials)   # single cross-lane reduce, off the hot loop
    if reduction == "mean":
        return loss_sum / total
    elif reduction == "sum":
        return loss_sum
    else:
        # TODO(synk): reduction='none' (full elementwise loss tensor) not implemented.
        raise NotImplementedError("only 'mean' and 'sum' reductions are supported")


def _reference(pred, true, gamma=GAMMA, alpha=ALPHA):
    x = pred.astype(jnp.float32)
    t = true.astype(jnp.float32)
    bce = jnp.maximum(x, 0.0) - x * t + jnp.log1p(jnp.exp(-jnp.abs(x)))
    p = jax.nn.sigmoid(x)
    loss = bce * (t * alpha + (1 - t) * (1 - alpha)) * jnp.abs(t - p) ** gamma
    return jnp.mean(loss)


if __name__ == "__main__":
    key = jax.random.PRNGKey(0)
    k1, k2, k3, k4, k5, k6 = jax.random.split(key, 6)

    # 1) NCHW-shaped logits/targets, as the PyTorch module would receive.
    #    2048 elements -> zero-copy (rows, 128) path, single tile, no masking.
    pred = jax.random.normal(k1, (2, 4, 16, 16), dtype=jnp.float32)
    true = (jax.random.uniform(k2, (2, 4, 16, 16)) > 0.7).astype(jnp.float32)
    out = jax.block_until_ready(qfocal_loss(pred, true))
    ref = _reference(pred, true)
    assert jnp.allclose(out, ref, rtol=2e-4, atol=1e-6), (out, ref)

    # 2) Odd-sized, non-128-divisible bf16 inputs: native-dtype DMA + zero-loss
    #    tail padding.
    pred2 = jax.random.normal(k3, (3, 5, 7, 9), dtype=jnp.bfloat16)
    true2 = (jax.random.uniform(k4, (3, 5, 7, 9)) > 0.7).astype(jnp.bfloat16)
    out2 = jax.block_until_ready(qfocal_loss(pred2, true2))
    ref2 = _reference(pred2, true2)
    assert jnp.allclose(out2, ref2, rtol=1e-3, atol=1e-5), (out2, ref2)

    # 3) Ragged multi-tile case with a small forced tile: exercises the 2-way
    #    split, the masked boundary tile and the skipped clamped spare tile
    #    (blocks_total=3 over a (2,2) grid).
    pred3 = jax.random.normal(k5, (4, 3, 61, 127), dtype=jnp.float32)
    true3 = (jax.random.uniform(k6, (4, 3, 61, 127)) > 0.7).astype(jnp.float32)
    out3 = jax.block_until_ready(qfocal_loss(pred3, true3, tile_bytes=256 * 1024))
    ref3 = _reference(pred3, true3)
    assert jnp.allclose(out3, ref3, rtol=5e-4, atol=1e-6), (out3, ref3)

    print("KERNEL_OK")
</pallas_src>

<mosaic_0001>
module attributes {stable_mosaic.version = 11 : i64} {
  func.func @_qfocal_sum_kernel(%arg0: i32, %arg1: i32, %arg2: memref<16x128xf32, #tpu.memory_space<vmem>>, %arg3: memref<16x128xf32, #tpu.memory_space<vmem>>, %arg4: memref<1x8x128xf32, #tpu.memory_space<vmem>>) attributes {dimension_semantics = [#tpu.dimension_semantics<parallel>, #tpu.dimension_semantics<arbitrary>], iteration_bounds = array<i64: 1, 1>, scalar_prefetch = 0 : i64, scratch_operands = 0 : i64, tpu.core_type = #tpu.core_type<tc>, window_params = [{transform_indices = @transform_0, window_bounds = array<i64: 16, 128>}, {transform_indices = @transform_1, window_bounds = array<i64: 16, 128>}, {transform_indices = @transform_2, window_bounds = array<i64: 1, 8, 128>}]} {
    %c0_i32 = arith.constant 0 : i32
    %0 = arith.cmpi eq, %arg1, %c0_i32 : i32
    %1 = arith.extui %0 : i1 to i32
    %c0_i32_0 = arith.constant 0 : i32
    %2 = arith.cmpi ne, %1, %c0_i32_0 : i32
    scf.if %2 {
      %cst_18 = arith.constant 0.000000e+00 : f32
      %47 = vector.broadcast %cst_18 : f32 to vector<1x8x128xf32>
      %c0_19 = arith.constant 0 : index
      %c0_20 = arith.constant 0 : index
      %c0_21 = arith.constant 0 : index
      %48 = vector.load %arg4[%c0_19, %c0_20, %c0_21] : memref<1x8x128xf32, #tpu.memory_space<vmem>>, vector<1x8x128xf32>
      tpu.vector_store %arg4[%c0_19, %c0_20, %c0_21], %47 {strides = array<i32>} : memref<1x8x128xf32, #tpu.memory_space<vmem>>, vector<1x8x128xf32>,
    } else {
    }
    %c0 = arith.constant 0 : index
    %c0_1 = arith.constant 0 : index
    %c0_2 = arith.constant 0 : index
    %3 = vector.load %arg4[%c0, %c0_1, %c0_2] : memref<1x8x128xf32, #tpu.memory_space<vmem>>, vector<1x8x128xf32>
    %cst = arith.constant 0.000000e+00 : f32
    %4 = vector.broadcast %cst : f32 to vector<8x128xf32>
    %c0_i32_3 = arith.constant 0 : i32
    %c16_i32 = arith.constant 16 : i32
    %5 = arith.muli %c0_i32_3, %c16_i32 : i32
    %6 = tpu.assume_multiple %5, 16 : i32
    %7 = arith.index_cast %6 : i32 to index
    %c0_4 = arith.constant 0 : index
    %8 = vector.load %arg2[%7, %c0_4] : memref<16x128xf32, #tpu.memory_space<vmem>>, vector<16x128xf32>
    %9 = arith.index_cast %6 : i32 to index
    %c0_5 = arith.constant 0 : index
    %10 = vector.load %arg3[%9, %c0_5] : memref<16x128xf32, #tpu.memory_space<vmem>>, vector<16x128xf32>
    %cst_6 = arith.constant 0.000000e+00 : f32
    %11 = vector.broadcast %cst_6 : f32 to vector<16x128xf32>
    %12 = arith.maximumf %8, %11 : vector<16x128xf32>
    %13 = arith.mulf %8, %10 : vector<16x128xf32>
    %14 = arith.subf %12, %13 : vector<16x128xf32>
    %15 = math.absf %8 : vector<16x128xf32>
    %cst_7 = arith.constant 0.000000e+00 : f32
    %16 = vector.broadcast %cst_7 : f32 to vector<16x128xf32>
    %17 = arith.subf %16, %15 : vector<16x128xf32>
    %18 = math.exp %17 : vector<16x128xf32>
    %19 = math.log1p %18 : vector<16x128xf32>
    %20 = arith.addf %14, %19 : vector<16x128xf32>
    %cst_8 = arith.constant 5.000000e-01 : f32
    %21 = vector.broadcast %cst_8 : f32 to vector<16x128xf32>
    %22 = arith.mulf %21, %8 : vector<16x128xf32>
    %23 = math.tanh %22 : vector<16x128xf32>
    %cst_9 = arith.constant 5.000000e-01 : f32
    %24 = vector.broadcast %cst_9 : f32 to vector<16x128xf32>
    %25 = arith.mulf %24, %23 : vector<16x128xf32>
    %cst_10 = arith.constant 5.000000e-01 : f32
    %26 = vector.broadcast %cst_10 : f32 to vector<16x128xf32>
    %27 = arith.addf %25, %26 : vector<16x128xf32>
    %cst_11 = arith.constant 2.500000e-01 : f32
    %28 = vector.broadcast %cst_11 : f32 to vector<16x128xf32>
    %29 = arith.mulf %10, %28 : vector<16x128xf32>
    %cst_12 = arith.constant 1.000000e+00 : f32
    %30 = vector.broadcast %cst_12 : f32 to vector<16x128xf32>
    %31 = arith.subf %30, %10 : vector<16x128xf32>
    %cst_13 = arith.constant 7.500000e-01 : f32
    %32 = vector.broadcast %cst_13 : f32 to vector<16x128xf32>
    %33 = arith.mulf %31, %32 : vector<16x128xf32>
    %34 = arith.addf %29, %33 : vector<16x128xf32>
    %35 = arith.subf %10, %27 : vector<16x128xf32>
    %36 = math.absf %35 : vector<16x128xf32>
    %37 = math.sqrt %36 : vector<16x128xf32>
    %38 = arith.mulf %36, %37 : vector<16x128xf32>
    %39 = arith.mulf %20, %34 : vector<16x128xf32>
    %40 = arith.mulf %39, %38 : vector<16x128xf32>
    %41 = vector.shape_cast %40 : vector<16x128xf32> to vector<2x8x128xf32>
    %cst_14 = arith.constant dense<0.000000e+00> : vector<8x128xf32>
    %42 = vector.multi_reduction <add>, %41, %cst_14 [0] : vector<2x8x128xf32> to vector<8x128xf32>
    %43 = arith.addf %4, %42 : vector<8x128xf32>
    %c1_i32 = arith.constant 1 : i32
    %44 = vector.shape_cast %43 : vector<8x128xf32> to vector<1x8x128xf32>
    %45 = arith.addf %3, %44 : vector<1x8x128xf32>
    %c0_15 = arith.constant 0 : index
    %c0_16 = arith.constant 0 : index
    %c0_17 = arith.constant 0 : index
    %46 = vector.load %arg4[%c0_15, %c0_16, %c0_17] : memref<1x8x128xf32, #tpu.memory_space<vmem>>, vector<1x8x128xf32>
    tpu.vector_store %arg4[%c0_15, %c0_16, %c0_17], %45 {strides = array<i32>} : memref<1x8x128xf32, #tpu.memory_space<vmem>>, vector<1x8x128xf32>,
    return
  }
  func.func @transform_0(%arg0: i32, %arg1: i32) -> (i32, i32) {
    %c1_i32 = arith.constant 1 : i32
    %0 = arith.muli %arg0, %c1_i32 : i32
    %1 = arith.addi %0, %arg1 : i32
    %c0_i32 = arith.constant 0 : i32
    %2 = arith.minsi %1, %c0_i32 : i32
    %c0_i32_0 = arith.constant 0 : i32
    %c0_i32_1 = arith.constant 0 : i32
    return %2, %c0_i32_0 : i32, i32
  }
  func.func @transform_1(%arg0: i32, %arg1: i32) -> (i32, i32) {
    %c1_i32 = arith.constant 1 : i32
    %0 = arith.muli %arg0, %c1_i32 : i32
    %1 = arith.addi %0, %arg1 : i32
    %c0_i32 = arith.constant 0 : i32
    %2 = arith.minsi %1, %c0_i32 : i32
    %c0_i32_0 = arith.constant 0 : i32
    %c0_i32_1 = arith.constant 0 : i32
    return %2, %c0_i32_0 : i32, i32
  }
  func.func @transform_2(%arg0: i32, %arg1: i32) -> (i32, i32, i32) {
    %c0_i32 = arith.constant 0 : i32
    %c0_i32_0 = arith.constant 0 : i32
    %c0_i32_1 = arith.constant 0 : i32
    return %arg0, %c0_i32, %c0_i32_0 : i32, i32, i32
  }
}

</mosaic_0001>

<llo_original>
// kernel: tpu_custom_call.1
$region0: #{tpu_custom_call.1}
  #allocation0 [shape = 'u32[]', space=smem, size = 0x4, offset = 0x4, fixed_abs, tag = 'smem constant byte address 0x4 - core index']
  #allocation1 [shape = 'u32[144,128]{1,0:T(1,128)}', space=vmem, size = 0x12000, scoped, tag = 'internal scratch']
  %s0 = inlined_call_operand.hbm [shape: f32[16,128], index: 0, kind: input, shape index: {}]
  %s1 = inlined_call_operand.hbm [shape: f32[16,128], index: 1, kind: input, shape index: {}]
  %s2 = inlined_call_operand.hbm [shape: f32[1,8,128], index: 2, kind: output, shape index: {}]
  %s3 = sld [smem:[#allocation0]]
  $region30: #{tpu_custom_call.1} parent=0
    _
  %s5 = ssub.s32 1, %s3
  %s6 = scalar_select 0, %s5, %s3
  $region1: #{tpu_custom_call.1} parent=0
    #allocation2 [shape = 'u8[8192]{0}', space=vmem, size = 0x2000, scoped, tag = 'input window, operand 0, single buffered']
    #allocation3 [shape = 's32[1]{0}', space=sflag, size = 0x4, scoped, tag = 'scoped memory for tpu_custom_call.1']
    #allocation4 [shape = 's32[1]{0}', space=sflag, size = 0x4, scoped, tag = 'scoped memory for tpu_custom_call.1']
    #allocation5 [shape = 'u8[8192]{0}', space=vmem, size = 0x2000, scoped, tag = 'input window, operand 1, single buffered']
    #allocation6 [shape = 's32[1]{0}', space=sflag, size = 0x4, scoped, tag = 'scoped memory for tpu_custom_call.1']
    #allocation7 [shape = 'u8[4096]{0}', space=vmem, size = 0x1000, scoped, tag = 'output window, operand 0, single buffered']
    %7 = vsyncpa [#allocation3], 0
    %8 = vsyncpa [#allocation6], 0
    %9 = vsyncpa [#allocation4], 0
    // Predicated region
    $region2: #{tpu_custom_call.1} parent=1 // pred_check
      _
    $region3: #{tpu_custom_call.1} parent=1 // pred_check_branch
      %11 = sbr.rel (0) target = $region5
    $region4: #{tpu_custom_call.1} parent=1 // pred_region
      %s12 = sadd.s32 0, 0
      %p13 = scmp.lt.s32.totalorder %s12, 0
      %s14 = scalar_select %p13, %s12, 0
      %s15 = smul.u32 2, %s14
      %s17 = ssub.s32 256, 256
      %18 = vsyncadd [#allocation3], %s17
      %s19 = smul.addr %s15, 128
      %s20 = scalar_lea.hbm %s0, %s19
      %s21 = sshll.u32 [#allocation2], 4
      %s22 = int_to_ptr.vmem [resolvable:$true] %s21
      %27 = dma.hbm_to_vmem [thread:$0]  %s20, 256, %s22, [#allocation3], 128, 128, 8
    $region5: #{tpu_custom_call.1} parent=1 // pred_fallthru
      _
    // Predicated region
    $region6: #{tpu_custom_call.1} parent=1 // pred_check
      _
    $region7: #{tpu_custom_call.1} parent=1 // pred_check_branch
      %29 = sbr.rel (0) target = $region9
    $region8: #{tpu_custom_call.1} parent=1 // pred_region
      %s30 = sadd.s32 0, 0
      %p31 = scmp.lt.s32.totalorder %s30, 0
      %s32 = scalar_select %p31, %s30, 0
      %s33 = smul.u32 2, %s32
      %s35 = ssub.s32 256, 256
      %36 = vsyncadd [#allocation6], %s35
      %s37 = smul.addr %s33, 128
      %s38 = scalar_lea.hbm %s1, %s37
      %s39 = sshll.u32 [#allocation5], 4
      %s40 = int_to_ptr.vmem [resolvable:$true] %s39
      %45 = dma.hbm_to_vmem [thread:$0]  %s38, 256, %s40, [#allocation6], 128, 128, 8
    $region9: #{tpu_custom_call.1} parent=1 // pred_fallthru
      _
    // Predicated region
    $region10: #{tpu_custom_call.1} parent=1 // pred_check
      _
    $region11: #{tpu_custom_call.1} parent=1 // pred_check_branch
      %47 = sbr.rel (0) target = $region13
    $region12: #{tpu_custom_call.1} parent=1 // pred_region
      %48 = dma.done [#allocation3], 256
    $region13: #{tpu_custom_call.1} parent=1 // pred_fallthru
      _
    // Predicated region
    $region14: #{tpu_custom_call.1} parent=1 // pred_check
      _
    $region15: #{tpu_custom_call.1} parent=1 // pred_check_branch
      %50 = sbr.rel (0) target = $region17
    $region16: #{tpu_custom_call.1} parent=1 // pred_region
      %51 = dma.done [#allocation6], 256
    $region17: #{tpu_custom_call.1} parent=1 // pred_fallthru
      _
    %s52 = sadd.s32 0, 0
    %p53 = scmp.lt.s32.totalorder %s52, 0
    %s54 = scalar_select %p53, %s52, 0
    %s55 = smul.u32 2, %s54
    %s56 = sadd.s32 0, 0
    %p57 = scmp.lt.s32.totalorder %s56, 0
    %s58 = scalar_select %p57, %s56, 0
    %s59 = smul.u32 2, %s58
    %p60 = scmp.eq.s32.totalorder 0, 0
    // Predicated region
    $region18: #{tpu_custom_call.1} parent=1 // pred_check
      %p61 = pneg %p60
    $region19: #{tpu_custom_call.1} parent=1 // pred_check_branch
      %63 = sbr.rel (%p61) target = $region21
    $region20: #{tpu_custom_call.1} parent=1 // pred_region
      %64 = vst [vmem:[#allocation7] sm:$0xff] 0.0
    $region21: #{tpu_custom_call.1} parent=1 // pred_fallthru
      _
    %v65 = vld [vmem:[#allocation7] sm:$0xff]
    %v66 = vld [vmem:[#allocation2] sm:$0xff]
    %v67 = vld [vmem:[#allocation2 + $0x8] sm:$0xff]
    %v68 = vld [vmem:[#allocation5] sm:$0xff]
    %v69 = vld [vmem:[#allocation5 + $0x8] sm:$0xff]
    %v70 = vmax.f32 %v66, 0.0
    %v71 = vmax.f32 %v67, 0.0
    %v72 = vmul.f32 %v66, %v68
    %v73 = vmul.f32 %v67, %v69
    %v74 = vsub.f32 %v70, %v72
    %v75 = vsub.f32 %v71, %v73
    %v76 = vand.u32 2147483647, %v66
    %v77 = vand.u32 2147483647, %v67
    %v78 = vsub.f32 0.0, %v76
    %v79 = vsub.f32 0.0, %v77
    %v80 = vmul.f32 %v78, 1.442695
    %v81 = vpow.pop %v80
    %v82 = vmul.f32 %v79, 1.442695
    %v83 = vpow.pop %v82
    %v84 = vadd.f32 %v81, 1.0
    %v85 = vlog2.pop %v84
    %v86 = vmul.f32 %v85, 0.6931472
    %v87 = vmul.f32 -0.5, %v81
    %v88 = vadd.f32 %v87, 1.0
    %v89 = vmul.f32 %v88, %v81
    %v90 = vand.u32 2147483647, %v81
    %vm91 = vcmp.lt.f32.partialorder %v90, 0.0004427343
    %v92 = vsel %vm91, %v89, %v86
    %v93 = vadd.f32 %v83, 1.0
    %v94 = vlog2.pop %v93
    %v95 = vmul.f32 %v94, 0.6931472
    %v96 = vmul.f32 -0.5, %v83
    %v97 = vadd.f32 %v96, 1.0
    %v98 = vmul.f32 %v97, %v83
    %v99 = vand.u32 2147483647, %v83
    %vm100 = vcmp.lt.f32.partialorder %v99, 0.0004427343
    %v101 = vsel %vm100, %v98, %v95
    %v102 = vadd.f32 %v74, %v92
    %v103 = vadd.f32 %v75, %v101
    %v104 = vmul.f32 %v66, 0.5
    %v105 = vmul.f32 %v67, 0.5
    %v106 = vtanh.pop %v104
    %v107 = vtanh.pop %v105
    %v108 = vmul.f32 %v106, 0.5
    %v109 = vmul.f32 %v107, 0.5
    %v110 = vadd.f32 %v108, 0.5
    %v111 = vadd.f32 %v109, 0.5
    %v112 = vmul.f32 %v68, 0.25
    %v113 = vmul.f32 %v69, 0.25
    %v114 = vsub.f32 1.0, %v68
    %v115 = vsub.f32 1.0, %v69
    %v116 = vmul.f32 %v114, 0.75
    %v117 = vmul.f32 %v115, 0.75
    %v118 = vadd.f32 %v112, %v116
    %v119 = vadd.f32 %v113, %v117
    %v120 = vsub.f32 %v68, %v110
    %v121 = vsub.f32 %v69, %v111
    %v122 = vand.u32 2147483647, %v120
    %v123 = vand.u32 2147483647, %v121
    %v124 = vrsqrt.pop %v122
    %v125 = vmul.f32 %v122, %v124
    %vm126 = vcmp.eq.f32.partialorder %v122, inf
    %v127 = vsel %vm126, %v122, %v125
    %vm128 = vcmp.eq.f32.partialorder %v122, 0.0
    %v129 = vand.u32 %v122, 2147483648
    %v130 = vsel %vm128, %v129, %v127
    %v131 = vrsqrt.pop %v123
    %v132 = vmul.f32 %v123, %v131
    %vm133 = vcmp.eq.f32.partialorder %v123, inf
    %v134 = vsel %vm133, %v123, %v132
    %vm135 = vcmp.eq.f32.partialorder %v123, 0.0
    %v136 = vand.u32 %v123, 2147483648
    %v137 = vsel %vm135, %v136, %v134
    %v138 = vmul.f32 %v122, %v130
    %v139 = vmul.f32 %v123, %v137
    %v140 = vmul.f32 %v102, %v118
    %v141 = vmul.f32 %v103, %v119
    %v142 = vmul.f32 %v140, %v138
    %v143 = vmul.f32 %v141, %v139
    %v144 = vadd.f32 %v142, %v143
    %v145 = vadd.f32 %v144, 0.0
    %v146 = vadd.f32 %v65, %v145
    %147 = vst [vmem:[#allocation7] sm:$0xff] %v146
    // Predicated region
    $region22: #{tpu_custom_call.1} parent=1 // pred_check
      _
    $region23: #{tpu_custom_call.1} parent=1 // pred_check_branch
      %149 = sbr.rel (0) target = $region25
    $region24: #{tpu_custom_call.1} parent=1 // pred_region
      %s151 = ssub.s32 128, 128
      %152 = vsyncadd [#allocation4], %s151
      %s154 = sshll.u32 [#allocation7], 4
      %s155 = int_to_ptr.vmem [resolvable:$true] %s154
      %157 = dma.vmem_to_hbm [thread:$0]  %s155, 128, %s2, [#allocation4]
    $region25: #{tpu_custom_call.1} parent=1 // pred_fallthru
      _
    // Predicated region
    $region26: #{tpu_custom_call.1} parent=1 // pred_check
      _
    $region27: #{tpu_custom_call.1} parent=1 // pred_check_branch
      %159 = sbr.rel (0) target = $region29
    $region28: #{tpu_custom_call.1} parent=1 // pred_region
      %160 = dma.done [#allocation4], 128
    $region29: #{tpu_custom_call.1} parent=1 // pred_fallthru
      _
    %161 = vsyncpa [#allocation3], 1
    %162 = vsyncpa [#allocation6], 1
    %163 = vsyncpa [#allocation4], 1

</llo_original>
